<compile_context>
chip_gen: v7x
topology: tpu7x:2x2x1
jax: 0.10.0
libtpu: 0.0.40
codegen_flags: <defaults>
</compile_context>

<pallas_src>
import numpy as np
import jax
import jax.numpy as jnp
from jax.experimental import pallas as pl
from jax.experimental.pallas import tpu as pltpu


def _round_up(x, m):
    return (x + m - 1) // m * m


# ----------------------------- kernel bodies -----------------------------
# Grid axes: (i = M tile, n = d_out tile, k = d_mid reduction step [last]).

def _ffn_kernel_fused(x_ref, w1_ref, b1_ref, w2_ref, b2_ref, o_ref):
    """Single reduction step (whole hidden dim in VMEM): no accumulator."""
    h = jnp.dot(x_ref[...], w1_ref[...], preferred_element_type=jnp.float32)
    h = jnp.maximum(h + b1_ref[...], 0.0)
    acc = jnp.dot(h.astype(w2_ref.dtype), w2_ref[...],
                  preferred_element_type=jnp.float32)
    o_ref[...] = (acc + b2_ref[...]).astype(o_ref.dtype)


def _ffn_kernel_acc_out(x_ref, w1_ref, b1_ref, w2_ref, b2_ref, o_ref):
    """Multi-step reduction, f32 output: accumulate directly into o_ref."""
    k = pl.program_id(2)

    @pl.when(k == 0)
    def _init():
        o_ref[...] = jnp.zeros_like(o_ref)

    h = jnp.dot(x_ref[...], w1_ref[...], preferred_element_type=jnp.float32)
    h = jnp.maximum(h + b1_ref[...], 0.0)
    o_ref[...] += jnp.dot(h.astype(w2_ref.dtype), w2_ref[...],
                          preferred_element_type=jnp.float32)

    @pl.when(k == pl.num_programs(2) - 1)
    def _finalize():
        o_ref[...] += b2_ref[...].astype(jnp.float32)


def _ffn_kernel_scratch(x_ref, w1_ref, b1_ref, w2_ref, b2_ref, o_ref, acc_ref):
    """Multi-step reduction, non-f32 output: f32 VMEM accumulator scratch."""
    k = pl.program_id(2)

    @pl.when(k == 0)
    def _init():
        acc_ref[...] = jnp.zeros_like(acc_ref)

    h = jnp.dot(x_ref[...], w1_ref[...], preferred_element_type=jnp.float32)
    h = jnp.maximum(h + b1_ref[...], 0.0)
    acc_ref[...] += jnp.dot(h.astype(w2_ref.dtype), w2_ref[...],
                            preferred_element_type=jnp.float32)

    @pl.when(k == pl.num_programs(2) - 1)
    def _finalize():
        o_ref[...] = (acc_ref[...] + b2_ref[...]).astype(o_ref.dtype)


# ----------------------------- host wrapper -----------------------------

def feed_forward(x, w1, b1, w2, b2, *, tm=512, tk=None, vmem_limit_bytes=None):
    """x: [..., d_in] -> [..., d_FF_out].  W1:[d_in,d_mid], W2:[d_mid,d_out].

    tk=None (default) -> VMEM-driven: single reduction step / resident weights
    when they fit, else streamed with tk up to 2048 (auto-shrunk to budget).
    Tip (v5e especially): pass bf16 x/W1/W2 (f32 biases) for ~3x MXU throughput.
    """
    *lead, d_in = x.shape
    M = int(np.prod(lead)) if lead else 1
    d_mid, d_out = w1.shape[1], w2.shape[1]
    out_dtype = x.dtype

    x_bytes = jnp.dtype(x.dtype).itemsize
    w_bytes = jnp.dtype(w1.dtype).itemsize
    out_bytes = jnp.dtype(out_dtype).itemsize
    f32_out = jnp.dtype(out_dtype) == jnp.dtype(jnp.float32)

    # Lane-align every contraction / output dim (padded lanes are exact zeros).
    d_in_pad = _round_up(d_in, 128)
    d_mid_pad = _round_up(d_mid, 128)
    d_out_pad = _round_up(d_out, 128)

    # ---------------- VMEM budget (generation aware: 64 MiB on v7x) ----------
    try:
        cap = int(pltpu.get_tpu_info().vmem_capacity_bytes)
        if cap <= 0:
            cap = 64 << 20
    except Exception:
        cap = 64 << 20
    if vmem_limit_bytes is None:
        vmem_limit_bytes = int(cap * 0.75)
    tile_budget = int(vmem_limit_bytes * 0.85)   # headroom for Mosaic internals

    def footprint(tm_, tk_, tn_, use_scratch):
        b = 2 * (tm_ * d_in_pad * x_bytes        # x block (double-buffered)
                 + d_in_pad * tk_ * w_bytes      # W1 block
                 + tk_ * 4                       # b1 block
                 + tk_ * tn_ * w_bytes           # W2 block
                 + tn_ * 4                       # b2 block
                 + tm_ * tn_ * out_bytes)        # out block
        if use_scratch:
            b += tm_ * tn_ * 4                   # f32 accumulator scratch
        return b

    # ---------------- token tile ----------------
    tm_eff = max(8, min(_round_up(tm, 8), _round_up(M, 8)))
    m_pad = _round_up(M, tm_eff)
    n_m = m_pad // tm_eff

    # ---------------- d_out tile: parallel N axis only when M tiles are scarce
    if n_m < 2 and d_out_pad >= 512:
        tn_eff = 256
        d_out_pad = _round_up(d_out_pad, tn_eff)
    else:
        tn_eff = d_out_pad

    # ---------------- reduction tile: resident (1 step) vs streamed ----------
    resident = (tk is None
                and footprint(tm_eff, d_mid_pad, tn_eff, False) <= tile_budget)
    if resident:
        tk_eff = d_mid_pad
    else:
        tk_eff = (min(2048, d_mid_pad) if tk is None
                  else min(d_mid_pad, max(128, (int(tk) // 128) * 128)))
        while True:
            n_k = _round_up(d_mid, tk_eff) // tk_eff
            sc = (not f32_out) and n_k > 1
            if footprint(tm_eff, tk_eff, tn_eff, sc) <= tile_budget:
                break
            if tk_eff > 128:
                tk_eff = max(128, (tk_eff // 2) // 128 * 128)
            elif tn_eff > 128:
                tn_eff = max(128, (tn_eff // 2) // 128 * 128)
                d_out_pad = _round_up(d_out_pad, tn_eff)
            elif tm_eff > 8:
                tm_eff = max(8, (tm_eff // 2) // 8 * 8)
                m_pad = _round_up(M, tm_eff)
            else:
                # Minimal tiles (d_in untiled): best-effort raise of the limit.
                vmem_limit_bytes = min(
                    cap, footprint(tm_eff, tk_eff, tn_eff, sc) + (8 << 20))
                break
        n_m = m_pad // tm_eff

    k_pad = _round_up(d_mid, tk_eff)
    n_k = k_pad // tk_eff
    n_n = d_out_pad // tn_eff

    # ---------------- padding (zero pad keeps the math exact) ----------------
    x2 = x.reshape(M, d_in)
    if m_pad != M or d_in_pad != d_in:
        x2 = jnp.pad(x2, ((0, m_pad - M), (0, d_in_pad - d_in)))
    w1p = w1
    if d_in_pad != d_in or k_pad != d_mid:
        w1p = jnp.pad(w1, ((0, d_in_pad - d_in), (0, k_pad - d_mid)))
    b1p = b1 if k_pad == d_mid else jnp.pad(b1, (0, k_pad - d_mid))
    w2p = w2
    if k_pad != d_mid or d_out_pad != d_out:
        w2p = jnp.pad(w2, ((0, k_pad - d_mid), (0, d_out_pad - d_out)))
    b2p = b2 if d_out_pad == d_out else jnp.pad(b2, (0, d_out_pad - d_out))
    b1_2 = b1p.reshape(1, k_pad)
    b2_2 = b2p.reshape(1, d_out_pad)

    # ---------------- kernel / scratch selection ----------------
    if n_k == 1:
        kernel = _ffn_kernel_fused
        scratch_shapes = []
    elif f32_out:
        kernel = _ffn_kernel_acc_out
        scratch_shapes = []
    else:
        kernel = _ffn_kernel_scratch
        scratch_shapes = [pltpu.VMEM((tm_eff, tn_eff), jnp.float32)]

    # ---------------- cost estimate (actual HBM traffic) ----------------
    flops = 2 * m_pad * d_in_pad * k_pad + 2 * m_pad * k_pad * d_out_pad
    w1_reads = 1 if n_k == 1 else n_m * n_n
    w2_reads = 1 if (n_k == 1 and n_n == 1) else n_m
    bytes_accessed = (m_pad * d_in_pad * x_bytes
                      + w1_reads * d_in_pad * k_pad * w_bytes
                      + w2_reads * k_pad * d_out_pad * w_bytes
                      + k_pad * jnp.dtype(b1.dtype).itemsize
                      + d_out_pad * jnp.dtype(b2.dtype).itemsize
                      + m_pad * d_out_pad * out_bytes)
    cost = pl.CostEstimate(flops=int(flops), transcendentals=0,
                           bytes_accessed=int(bytes_accessed))

    grid = (n_m, n_n, n_k)
    out = pl.pallas_call(
        kernel,
        out_shape=jax.ShapeDtypeStruct((m_pad, d_out_pad), out_dtype),
        grid_spec=pltpu.PrefetchScalarGridSpec(
            num_scalar_prefetch=0,
            grid=grid,
            in_specs=[
                pl.BlockSpec((tm_eff, d_in_pad), lambda i, n, k: (i, 0)),
                pl.BlockSpec((d_in_pad, tk_eff), lambda i, n, k: (0, k)),
                pl.BlockSpec((1, tk_eff), lambda i, n, k: (0, k)),
                pl.BlockSpec((tk_eff, tn_eff), lambda i, n, k: (k, n)),
                pl.BlockSpec((1, tn_eff), lambda i, n, k: (0, n)),
            ],
            out_specs=pl.BlockSpec((tm_eff, tn_eff), lambda i, n, k: (i, n)),
            scratch_shapes=scratch_shapes,
        ),
        compiler_params=pltpu.CompilerParams(
            dimension_semantics=("parallel", "parallel", "arbitrary"),
            vmem_limit_bytes=int(vmem_limit_bytes)),
        cost_estimate=cost,
    )(x2, w1p, b1_2, w2p, b2_2)

    out = out[:M, :d_out]
    return out.reshape(*lead, d_out)


def init_params(key, d_in, d_middle, d_ff_out, dtype=jnp.float32):
    """Deterministic init mirroring nn.Linear's U(-1/sqrt(fan_in), 1/sqrt(fan_in))."""
    k1, k2, k3, k4 = jax.random.split(key, 4)
    lim1 = 1.0 / np.sqrt(d_in)
    lim2 = 1.0 / np.sqrt(d_middle)
    # Stored as [in, out] (transposed relative to PyTorch's [out, in]).
    w1 = jax.random.uniform(k1, (d_in, d_middle), dtype, -lim1, lim1)
    b1 = jax.random.uniform(k2, (d_middle,), dtype, -lim1, lim1)
    w2 = jax.random.uniform(k3, (d_middle, d_ff_out), dtype, -lim2, lim2)
    b2 = jax.random.uniform(k4, (d_ff_out,), dtype, -lim2, lim2)
    return w1, b1, w2, b2


if __name__ == "__main__":
    # Small, lane-friendly demo shapes: x is [batch, seq, d_model].
    batch, seq = 2, 8
    d_model, d_middle, d_ff_out = 128, 256, 128

    key = jax.random.PRNGKey(0)
    kx, kp = jax.random.split(key)
    x = jax.random.normal(kx, (batch, seq, d_model), jnp.float32)
    w1, b1, w2, b2 = init_params(kp, d_model, d_middle, d_ff_out)

    ref = jnp.maximum(x @ w1 + b1, 0.0) @ w2 + b2

    # 1) f32, default (VMEM-resident weights, single reduction step, fused).
    out = jax.block_until_ready(feed_forward(x, w1, b1, w2, b2))
    assert out.shape == (batch, seq, d_ff_out)
    np.testing.assert_allclose(np.asarray(out), np.asarray(ref),
                               rtol=2e-5, atol=2e-5)

    # 2) f32, forced multi-tile streamed grid (2 M tiles x 2 reduction steps):
    #    exercises the accumulate-into-output path.
    out2 = jax.block_until_ready(feed_forward(x, w1, b1, w2, b2, tm=8, tk=128))
    np.testing.assert_allclose(np.asarray(out2), np.asarray(ref),
                               rtol=2e-5, atol=2e-5)

    # 3) bf16 weights/activations, forced multi-step reduction: exercises the
    #    f32-scratch path.  (h is downcast to bf16 before the second matmul.)
    out3 = jax.block_until_ready(
        feed_forward(x.astype(jnp.bfloat16), w1.astype(jnp.bfloat16), b1,
                     w2.astype(jnp.bfloat16), b2, tk=128))
    np.testing.assert_allclose(np.asarray(out3.astype(jnp.float32)),
                               np.asarray(ref), rtol=5e-2, atol=5e-2)

    # 4) Ragged shapes: exercises M / d_in / d_mid / d_out padding paths.
    d_in_o, d_mid_o, d_out_o = 96, 300, 72
    kx2, kp2 = jax.random.split(jax.random.PRNGKey(1))
    xo = jax.random.normal(kx2, (1, 5, d_in_o), jnp.float32)
    w1o, b1o, w2o, b2o = init_params(kp2, d_in_o, d_mid_o, d_out_o)
    refo = jnp.maximum(xo @ w1o + b1o, 0.0) @ w2o + b2o
    outo = jax.block_until_ready(feed_forward(xo, w1o, b1o, w2o, b2o))
    np.testing.assert_allclose(np.asarray(outo), np.asarray(refo),
                               rtol=2e-5, atol=2e-5)
    outo2 = jax.block_until_ready(feed_forward(xo, w1o, b1o, w2o, b2o, tk=128))
    np.testing.assert_allclose(np.asarray(outo2), np.asarray(refo),
                               rtol=2e-5, atol=2e-5)

    # 5) Few M tiles + wide d_out: exercises the d_out-parallel grid axis.
    kx3, kp3 = jax.random.split(jax.random.PRNGKey(2))
    xn = jax.random.normal(kx3, (1, 8, 128), jnp.float32)
    w1n, b1n, w2n, b2n = init_params(kp3, 128, 256, 512)
    refn = jnp.maximum(xn @ w1n + b1n, 0.0) @ w2n + b2n
    outn = jax.block_until_ready(feed_forward(xn, w1n, b1n, w2n, b2n))
    np.testing.assert_allclose(np.asarray(outn), np.asarray(refn),
                               rtol=2e-5, atol=2e-5)

    print("KERNEL_OK")
</pallas_src>

<mosaic_0001>
module attributes {stable_mosaic.version = 11 : i64} {
  func.func @_ffn_kernel_fused(%arg0: i32, %arg1: i32, %arg2: i32, %arg3: memref<16x128xf32, #tpu.memory_space<vmem>>, %arg4: memref<128x256xf32, #tpu.memory_space<vmem>>, %arg5: memref<1x256xf32, #tpu.memory_space<vmem>>, %arg6: memref<256x128xf32, #tpu.memory_space<vmem>>, %arg7: memref<1x128xf32, #tpu.memory_space<vmem>>, %arg8: memref<16x128xf32, #tpu.memory_space<vmem>>) attributes {dimension_semantics = [#tpu.dimension_semantics<parallel>, #tpu.dimension_semantics<parallel>, #tpu.dimension_semantics<arbitrary>], iteration_bounds = array<i64: 1, 1, 1>, scalar_prefetch = 0 : i64, scratch_operands = 0 : i64, tpu.core_type = #tpu.core_type<tc>, window_params = [{transform_indices = @transform_0, window_bounds = array<i64: 16, 128>}, {transform_indices = @transform_1, window_bounds = array<i64: 128, 256>}, {transform_indices = @transform_2, window_bounds = array<i64: 1, 256>}, {transform_indices = @transform_3, window_bounds = array<i64: 256, 128>}, {transform_indices = @transform_4, window_bounds = array<i64: 1, 128>}, {transform_indices = @transform_5, window_bounds = array<i64: 16, 128>}]} {
    %c0 = arith.constant 0 : index
    %c0_0 = arith.constant 0 : index
    %0 = vector.load %arg3[%c0, %c0_0] : memref<16x128xf32, #tpu.memory_space<vmem>>, vector<16x128xf32>
    %c0_1 = arith.constant 0 : index
    %c0_2 = arith.constant 0 : index
    %1 = vector.load %arg4[%c0_1, %c0_2] : memref<128x256xf32, #tpu.memory_space<vmem>>, vector<128x256xf32>
    %cst = arith.constant dense<0.000000e+00> : vector<16x256xf32>
    %2 = tpu.matmul %0, %1, %cst {dimension_numbers = #tpu.dot_dimension_numbers<[1], [0], [0], [1], [0, 0, 1, 1], [], []>} : vector<16x128xf32>, vector<128x256xf32>, vector<16x256xf32> -> vector<16x256xf32>
    %c0_3 = arith.constant 0 : index
    %c0_4 = arith.constant 0 : index
    %3 = vector.load %arg5[%c0_3, %c0_4] : memref<1x256xf32, #tpu.memory_space<vmem>>, vector<1x256xf32>
    %4 = vector.broadcast %3 : vector<1x256xf32> to vector<16x256xf32>
    %5 = arith.addf %2, %4 : vector<16x256xf32>
    %cst_5 = arith.constant 0.000000e+00 : f32
    %6 = vector.broadcast %cst_5 : f32 to vector<16x256xf32>
    %7 = arith.maximumf %5, %6 : vector<16x256xf32>
    %c0_6 = arith.constant 0 : index
    %c0_7 = arith.constant 0 : index
    %8 = vector.load %arg6[%c0_6, %c0_7] : memref<256x128xf32, #tpu.memory_space<vmem>>, vector<256x128xf32>
    %cst_8 = arith.constant dense<0.000000e+00> : vector<16x128xf32>
    %9 = tpu.matmul %7, %8, %cst_8 {dimension_numbers = #tpu.dot_dimension_numbers<[1], [0], [0], [1], [0, 0, 1, 1], [], []>} : vector<16x256xf32>, vector<256x128xf32>, vector<16x128xf32> -> vector<16x128xf32>
    %c0_9 = arith.constant 0 : index
    %c0_10 = arith.constant 0 : index
    %10 = vector.load %arg7[%c0_9, %c0_10] : memref<1x128xf32, #tpu.memory_space<vmem>>, vector<1x128xf32>
    %11 = vector.broadcast %10 : vector<1x128xf32> to vector<16x128xf32>
    %12 = arith.addf %9, %11 : vector<16x128xf32>
    %c0_11 = arith.constant 0 : index
    %c0_12 = arith.constant 0 : index
    %13 = vector.load %arg8[%c0_11, %c0_12] : memref<16x128xf32, #tpu.memory_space<vmem>>, vector<16x128xf32>
    tpu.vector_store %arg8[%c0_11, %c0_12], %12 {strides = array<i32>} : memref<16x128xf32, #tpu.memory_space<vmem>>, vector<16x128xf32>,
    return
  }
  func.func @transform_0(%arg0: i32, %arg1: i32, %arg2: i32) -> (i32, i32) {
    %c0_i32 = arith.constant 0 : i32
    %c0_i32_0 = arith.constant 0 : i32
    return %arg0, %c0_i32 : i32, i32
  }
  func.func @transform_1(%arg0: i32, %arg1: i32, %arg2: i32) -> (i32, i32) {
    %c0_i32 = arith.constant 0 : i32
    %c0_i32_0 = arith.constant 0 : i32
    return %c0_i32, %arg2 : i32, i32
  }
  func.func @transform_2(%arg0: i32, %arg1: i32, %arg2: i32) -> (i32, i32) {
    %c0_i32 = arith.constant 0 : i32
    %c0_i32_0 = arith.constant 0 : i32
    return %c0_i32, %arg2 : i32, i32
  }
  func.func @transform_3(%arg0: i32, %arg1: i32, %arg2: i32) -> (i32, i32) {
    %c0_i32 = arith.constant 0 : i32
    return %arg2, %arg1 : i32, i32
  }
  func.func @transform_4(%arg0: i32, %arg1: i32, %arg2: i32) -> (i32, i32) {
    %c0_i32 = arith.constant 0 : i32
    %c0_i32_0 = arith.constant 0 : i32
    return %c0_i32, %arg1 : i32, i32
  }
  func.func @transform_5(%arg0: i32, %arg1: i32, %arg2: i32) -> (i32, i32) {
    %c0_i32 = arith.constant 0 : i32
    return %arg0, %arg1 : i32, i32
  }
}

</mosaic_0001>

<llo_original>
// kernel: tpu_custom_call.1
$region0: #{tpu_custom_call.1}
  #allocation0 [shape = 'u32[]', space=smem, size = 0x4, offset = 0x4, fixed_abs, tag = 'smem constant byte address 0x4 - core index']
  #allocation1 [shape = 'u32[144,128]{1,0:T(1,128)}', space=vmem, size = 0x12000, scoped, tag = 'internal scratch']
  %s0 = inlined_call_operand.hbm [shape: f32[16,128], index: 0, kind: input, shape index: {}]
  %s1 = inlined_call_operand.hbm [shape: f32[128,256], index: 1, kind: input, shape index: {}]
  %s2 = inlined_call_operand.vmem [shape: f32[1,256], index: 2, kind: input, shape index: {}]
  %s3 = inlined_call_operand.hbm [shape: f32[256,128], index: 3, kind: input, shape index: {}]
  %s4 = inlined_call_operand.vmem [shape: f32[1,128], index: 4, kind: input, shape index: {}]
  %s5 = inlined_call_operand.hbm [shape: f32[16,128], index: 5, kind: output, shape index: {}]
  %s6 = sld [smem:[#allocation0]]
  $region42: #{tpu_custom_call.1} parent=0
    _
  %s8 = ssub.s32 1, %s6
  %s9 = scalar_select 0, %s8, %s6
  $region1: #{tpu_custom_call.1} parent=0
    #allocation2 [shape = 'u8[8192]{0}', space=vmem, size = 0x2000, scoped, tag = 'input window, operand 0, single buffered']
    #allocation3 [shape = 's32[1]{0}', space=sflag, size = 0x4, scoped, tag = 'scoped memory for tpu_custom_call.1']
    #allocation4 [shape = 's32[1]{0}', space=sflag, size = 0x4, scoped, tag = 'scoped memory for tpu_custom_call.1']
    #allocation5 [shape = 'u8[131072]{0}', space=vmem, size = 0x20000, scoped, tag = 'input window, operand 1, single buffered']
    #allocation6 [shape = 's32[1]{0}', space=sflag, size = 0x4, scoped, tag = 'scoped memory for tpu_custom_call.1']
    #allocation7 [shape = 'u8[131072]{0}', space=vmem, size = 0x20000, scoped, tag = 'input window, operand 3, single buffered']
    #allocation8 [shape = 'u8[8192]{0}', space=vmem, size = 0x2000, scoped, tag = 'output window, operand 0, single buffered']
    %10 = vsyncpa [#allocation3], 0
    %11 = vsyncpa [#allocation6], 0
    %12 = vsyncpa [#allocation4], 0
    // Predicated region
    $region2: #{tpu_custom_call.1} parent=1 // pred_check
      _
    $region3: #{tpu_custom_call.1} parent=1 // pred_check_branch
      %14 = sbr.rel (0) target = $region5
    $region4: #{tpu_custom_call.1} parent=1 // pred_region
      %s16 = ssub.s32 256, 256
      %17 = vsyncadd [#allocation3], %s16
      %s18 = sshll.u32 [#allocation2], 4
      %s19 = int_to_ptr.vmem [resolvable:$true] %s18
      %24 = dma.hbm_to_vmem [thread:$0]  %s0, 256, %s19, [#allocation3], 128, 128, 8
    $region5: #{tpu_custom_call.1} parent=1 // pred_fallthru
      _
    // Predicated region
    $region6: #{tpu_custom_call.1} parent=1 // pred_check
      _
    $region7: #{tpu_custom_call.1} parent=1 // pred_check_branch
      %26 = sbr.rel (0) target = $region9
    $region8: #{tpu_custom_call.1} parent=1 // pred_region
      %s28 = ssub.s32 4096, 4096
      %29 = vsyncadd [#allocation6], %s28
      %s30 = sshll.u32 [#allocation5], 4
      %s31 = int_to_ptr.vmem [resolvable:$true] %s30
      %36 = dma.hbm_to_vmem [thread:$0]  %s1, 4096, %s31, [#allocation6], 256, 256, 16
    $region9: #{tpu_custom_call.1} parent=1 // pred_fallthru
      _
    // Predicated region
    $region10: #{tpu_custom_call.1} parent=1 // pred_check
      _
    $region11: #{tpu_custom_call.1} parent=1 // pred_check_branch
      %38 = sbr.rel (0) target = $region13
    $region12: #{tpu_custom_call.1} parent=1 // pred_region
      _
    $region13: #{tpu_custom_call.1} parent=1 // pred_fallthru
      _
    // Predicated region
    $region14: #{tpu_custom_call.1} parent=1 // pred_check
      _
    $region15: #{tpu_custom_call.1} parent=1 // pred_check_branch
      %40 = sbr.rel (0) target = $region17
    $region16: #{tpu_custom_call.1} parent=1 // pred_region
      %s42 = ssub.s32 4096, 4096
      %43 = vsyncadd [#allocation6], %s42
      %s44 = sshll.u32 [#allocation7], 4
      %s45 = int_to_ptr.vmem [resolvable:$true] %s44
      %50 = dma.hbm_to_vmem [thread:$0]  %s3, 4096, %s45, [#allocation6], 128, 128, 8
    $region17: #{tpu_custom_call.1} parent=1 // pred_fallthru
      _
    // Predicated region
    $region18: #{tpu_custom_call.1} parent=1 // pred_check
      _
    $region19: #{tpu_custom_call.1} parent=1 // pred_check_branch
      %52 = sbr.rel (0) target = $region21
    $region20: #{tpu_custom_call.1} parent=1 // pred_region
      _
    $region21: #{tpu_custom_call.1} parent=1 // pred_fallthru
      _
    // Predicated region
    $region22: #{tpu_custom_call.1} parent=1 // pred_check
      _
    $region23: #{tpu_custom_call.1} parent=1 // pred_check_branch
      %54 = sbr.rel (0) target = $region25
    $region24: #{tpu_custom_call.1} parent=1 // pred_region
      %55 = dma.done [#allocation3], 256
    $region25: #{tpu_custom_call.1} parent=1 // pred_fallthru
      _
    // Predicated region
    $region26: #{tpu_custom_call.1} parent=1 // pred_check
      _
    $region27: #{tpu_custom_call.1} parent=1 // pred_check_branch
      %57 = sbr.rel (0) target = $region29
    $region28: #{tpu_custom_call.1} parent=1 // pred_region
      %58 = dma.done [#allocation6], 4096
    $region29: #{tpu_custom_call.1} parent=1 // pred_fallthru
      _
    // Predicated region
    $region30: #{tpu_custom_call.1} parent=1 // pred_check
      _
    $region31: #{tpu_custom_call.1} parent=1 // pred_check_branch
      %60 = sbr.rel (0) target = $region33
    $region32: #{tpu_custom_call.1} parent=1 // pred_region
      %61 = dma.done [#allocation6], 4096
    $region33: #{tpu_custom_call.1} parent=1 // pred_fallthru
      _
    %v62 = vld [vmem:[#allocation2] sm:$0xff]
    %v63 = vld [vmem:[#allocation2 + $0x8] sm:$0xff]
    %v64 = vld [vmem:[#allocation5] sm:$0xff]
    %v65 = vld [vmem:[#allocation5 + $0x8] sm:$0xff]
    %v66 = vld [vmem:[#allocation5 + $0x10] sm:$0xff]
    %v67 = vld [vmem:[#allocation5 + $0x18] sm:$0xff]
    %v68 = vld [vmem:[#allocation5 + $0x20] sm:$0xff]
    %v69 = vld [vmem:[#allocation5 + $0x28] sm:$0xff]
    %v70 = vld [vmem:[#allocation5 + $0x30] sm:$0xff]
    %v71 = vld [vmem:[#allocation5 + $0x38] sm:$0xff]
    %v72 = vld [vmem:[#allocation5 + $0x40] sm:$0xff]
    %v73 = vld [vmem:[#allocation5 + $0x48] sm:$0xff]
    %v74 = vld [vmem:[#allocation5 + $0x50] sm:$0xff]
    %v75 = vld [vmem:[#allocation5 + $0x58] sm:$0xff]
    %v76 = vld [vmem:[#allocation5 + $0x60] sm:$0xff]
    %v77 = vld [vmem:[#allocation5 + $0x68] sm:$0xff]
    %v78 = vld [vmem:[#allocation5 + $0x70] sm:$0xff]
    %v79 = vld [vmem:[#allocation5 + $0x78] sm:$0xff]
    %v80 = vld [vmem:[#allocation5 + $0x80] sm:$0xff]
    %v81 = vld [vmem:[#allocation5 + $0x88] sm:$0xff]
    %v82 = vld [vmem:[#allocation5 + $0x90] sm:$0xff]
    %v83 = vld [vmem:[#allocation5 + $0x98] sm:$0xff]
    %v84 = vld [vmem:[#allocation5 + $0xa0] sm:$0xff]
    %v85 = vld [vmem:[#allocation5 + $0xa8] sm:$0xff]
    %v86 = vld [vmem:[#allocation5 + $0xb0] sm:$0xff]
    %v87 = vld [vmem:[#allocation5 + $0xb8] sm:$0xff]
    %v88 = vld [vmem:[#allocation5 + $0xc0] sm:$0xff]
    %v89 = vld [vmem:[#allocation5 + $0xc8] sm:$0xff]
    %v90 = vld [vmem:[#allocation5 + $0xd0] sm:$0xff]
    %v91 = vld [vmem:[#allocation5 + $0xd8] sm:$0xff]
    %v92 = vld [vmem:[#allocation5 + $0xe0] sm:$0xff]
    %v93 = vld [vmem:[#allocation5 + $0xe8] sm:$0xff]
    %v94 = vld [vmem:[#allocation5 + $0xf0] sm:$0xff]
    %v95 = vld [vmem:[#allocation5 + $0xf8] sm:$0xff]
    %v96 = vld [vmem:[%s2] sm:$0x3]
    %v98 = vlaneseq
    %v99 = vshrl.u32 %v98, 7
    %v100 = vsub.s32 0, %v99
    %v101 = vrot.slane %v96, %v100
    %v102 = vlaneseq
    %v103 = vshrl.u32 %v102, 7
    %v104 = vsub.s32 1, %v103
    %v105 = vrot.slane %v96, %v104
    %108 = vmatprep.subr.mxu0 %v65
    %109 = vmatpush1.msra.mxu0 %v64
    %110 = vmatprep.subr.mxu0 %v67
    %111 = vmatpush1.msra.mxu0 %v66
    %112 = vmatprep.subr.mxu0 %v69
    %113 = vmatpush1.msra.mxu0 %v68
    %114 = vmatprep.subr.mxu0 %v71
    %115 = vmatpush1.msra.mxu0 %v70
    %116 = vmatprep.subr.mxu0 %v73
    %117 = vmatpush1.msra.mxu0 %v72
    %118 = vmatprep.subr.mxu0 %v75
    %119 = vmatpush1.msra.mxu0 %v74
    %120 = vmatprep.subr.mxu0 %v77
    %121 = vmatpush1.msra.mxu0 %v76
    %122 = vmatprep.subr.mxu0 %v79
    %123 = vmatpush1.msra.mxu0 %v78
    %124 = vmatprep.subr.mxu0 %v81
    %125 = vmatpush1.msra.mxu0 %v80
    %126 = vmatprep.subr.mxu0 %v83
    %127 = vmatpush1.msra.mxu0 %v82
    %128 = vmatprep.subr.mxu0 %v85
    %129 = vmatpush1.msra.mxu0 %v84
    %130 = vmatprep.subr.mxu0 %v87
    %131 = vmatpush1.msra.mxu0 %v86
    %132 = vmatprep.subr.mxu0 %v89
    %133 = vmatpush1.msra.mxu0 %v88
    %134 = vmatprep.subr.mxu0 %v91
    %135 = vmatpush1.msra.mxu0 %v90
    %136 = vmatprep.subr.mxu0 %v93
    %137 = vmatpush1.msra.mxu0 %v92
    %138 = vmatprep.subr.mxu0 %v95
    %139 = vmatpush1.msra.mxu0 %v94
    %140 = vmatprep.subr.mxu0 0.0
    %141 = vmatpush1.msra.mxu0 0.0
    %142 = vmatprep.subr.mxu0 0.0
    %143 = vmatpush1.msra.mxu0 0.0
    %144 = vmatprep.subr.mxu0 0.0
    %145 = vmatpush1.msra.mxu0 0.0
    %146 = vmatprep.subr.mxu0 0.0
    %147 = vmatpush1.msra.mxu0 0.0
    %148 = vmatprep.subr.mxu0 0.0
    %149 = vmatpush1.msra.mxu0 0.0
    %150 = vmatprep.subr.mxu0 0.0
    %151 = vmatpush1.msra.mxu0 0.0
    %152 = vmatprep.subr.mxu0 0.0
    %153 = vmatpush1.msra.mxu0 0.0
    %154 = vmatprep.subr.mxu0 0.0
    %155 = vmatpush1.msra.mxu0 0.0
    %156 = vmatprep.subr.mxu0 0.0
    %157 = vmatpush1.msra.mxu0 0.0
    %158 = vmatprep.subr.mxu0 0.0
    %159 = vmatpush1.msra.mxu0 0.0
    %160 = vmatprep.subr.mxu0 0.0
    %161 = vmatpush1.msra.mxu0 0.0
    %162 = vmatprep.subr.mxu0 0.0
    %163 = vmatpush1.msra.mxu0 0.0
    %164 = vmatprep.subr.mxu0 0.0
    %165 = vmatpush1.msra.mxu0 0.0
    %166 = vmatprep.subr.mxu0 0.0
    %167 = vmatpush1.msra.mxu0 0.0
    %168 = vmatprep.subr.mxu0 0.0
    %169 = vmatpush1.msra.mxu0 0.0
    %170 = vmatprep.subr.mxu0 0.0
    %171 = vmatpush1.msra.mxu0 0.0
    %172 = vmatprep.mubr.f32.mxu0 0.0
    %173 = vmatmul.mubr.f32.gmra.mrb[0].mxu0 %v62
    %v174 = vpop.f32.mrb[0].mxu0
    %v175 = vadd.f32 %v101, %v174
    %v176 = vpop.f32.mrb[0].mxu0
    %v177 = vadd.f32 %v105, %v176
    %178 = vmatprep.mubr.f32.mxu0 0.0
    %179 = vmatmul.mubr.f32.gmra.mrb[0].mxu0 %v63
    %v180 = vpop.f32.mrb[0].mxu0
    %v181 = vadd.f32 %v101, %v180
    %v182 = vpop.f32.mrb[0].mxu0
    %v183 = vadd.f32 %v105, %v182
    %184 = vdwg.mxu0
    %v185 = vmax.f32 %v175, 0.0
    %v186 = vmax.f32 %v177, 0.0
    %v187 = vmax.f32 %v181, 0.0
    %v188 = vmax.f32 %v183, 0.0
    %v189 = vld [vmem:[#allocation7] sm:$0xff]
    %v190 = vld [vmem:[#allocation7 + $0x8] sm:$0xff]
    %v191 = vld [vmem:[#allocation7 + $0x10] sm:$0xff]
    %v192 = vld [vmem:[#allocation7 + $0x18] sm:$0xff]
    %v193 = vld [vmem:[#allocation7 + $0x20] sm:$0xff]
    %v194 = vld [vmem:[#allocation7 + $0x28] sm:$0xff]
    %v195 = vld [vmem:[#allocation7 + $0x30] sm:$0xff]
    %v196 = vld [vmem:[#allocation7 + $0x38] sm:$0xff]
    %v197 = vld [vmem:[#allocation7 + $0x40] sm:$0xff]
    %v198 = vld [vmem:[#allocation7 + $0x48] sm:$0xff]
    %v199 = vld [vmem:[#allocation7 + $0x50] sm:$0xff]
    %v200 = vld [vmem:[#allocation7 + $0x58] sm:$0xff]
    %v201 = vld [vmem:[#allocation7 + $0x60] sm:$0xff]
    %v202 = vld [vmem:[#allocation7 + $0x68] sm:$0xff]
    %v203 = vld [vmem:[#allocation7 + $0x70] sm:$0xff]
    %v204 = vld [vmem:[#allocation7 + $0x78] sm:$0xff]
    %v205 = vld [vmem:[#allocation7 + $0x80] sm:$0xff]
    %v206 = vld [vmem:[#allocation7 + $0x88] sm:$0xff]
    %v207 = vld [vmem:[#allocation7 + $0x90] sm:$0xff]
    %v208 = vld [vmem:[#allocation7 + $0x98] sm:$0xff]
    %v209 = vld [vmem:[#allocation7 + $0xa0] sm:$0xff]
    %v210 = vld [vmem:[#allocation7 + $0xa8] sm:$0xff]
    %v211 = vld [vmem:[#allocation7 + $0xb0] sm:$0xff]
    %v212 = vld [vmem:[#allocation7 + $0xb8] sm:$0xff]
    %v213 = vld [vmem:[#allocation7 + $0xc0] sm:$0xff]
    %v214 = vld [vmem:[#allocation7 + $0xc8] sm:$0xff]
    %v215 = vld [vmem:[#allocation7 + $0xd0] sm:$0xff]
    %v216 = vld [vmem:[#allocation7 + $0xd8] sm:$0xff]
    %v217 = vld [vmem:[#allocation7 + $0xe0] sm:$0xff]
    %v218 = vld [vmem:[#allocation7 + $0xe8] sm:$0xff]
    %v219 = vld [vmem:[#allocation7 + $0xf0] sm:$0xff]
    %v220 = vld [vmem:[#allocation7 + $0xf8] sm:$0xff]
    %v221 = vld [vmem:[%s4] sm:$0x1]
    %v223 = vlaneseq
    %v224 = vshrl.u32 %v223, 7
    %v225 = vsub.s32 0, %v224
    %v226 = vrot.slane %v221, %v225
    %228 = vmatprep.subr.mxu0 0.0
    %229 = vmatpush1.msra.mxu0 %v189
    %230 = vmatprep.subr.mxu0 0.0
    %231 = vmatpush1.msra.mxu0 %v190
    %232 = vmatprep.subr.mxu0 0.0
    %233 = vmatpush1.msra.mxu0 %v191
    %234 = vmatprep.subr.mxu0 0.0
    %235 = vmatpush1.msra.mxu0 %v192
    %236 = vmatprep.subr.mxu0 0.0
    %237 = vmatpush1.msra.mxu0 %v193
    %238 = vmatprep.subr.mxu0 0.0
    %239 = vmatpush1.msra.mxu0 %v194
    %240 = vmatprep.subr.mxu0 0.0
    %241 = vmatpush1.msra.mxu0 %v195
    %242 = vmatprep.subr.mxu0 0.0
    %243 = vmatpush1.msra.mxu0 %v196
    %244 = vmatprep.subr.mxu0 0.0
    %245 = vmatpush1.msra.mxu0 %v197
    %246 = vmatprep.subr.mxu0 0.0
    %247 = vmatpush1.msra.mxu0 %v198
    %248 = vmatprep.subr.mxu0 0.0
    %249 = vmatpush1.msra.mxu0 %v199
    %250 = vmatprep.subr.mxu0 0.0
    %251 = vmatpush1.msra.mxu0 %v200
    %252 = vmatprep.subr.mxu0 0.0
    %253 = vmatpush1.msra.mxu0 %v201
    %254 = vmatprep.subr.mxu0 0.0
    %255 = vmatpush1.msra.mxu0 %v202
    %256 = vmatprep.subr.mxu0 0.0
    %257 = vmatpush1.msra.mxu0 %v203
    %258 = vmatprep.subr.mxu0 0.0
    %259 = vmatpush1.msra.mxu0 %v204
    %260 = vmatprep.subr.mxu0 0.0
    %261 = vmatpush1.msra.mxu0 %v205
    %262 = vmatprep.subr.mxu0 0.0
    %263 = vmatpush1.msra.mxu0 %v206
    %264 = vmatprep.subr.mxu0 0.0
    %265 = vmatpush1.msra.mxu0 %v207
    %266 = vmatprep.subr.mxu0 0.0
    %267 = vmatpush1.msra.mxu0 %v208
    %268 = vmatprep.subr.mxu0 0.0
    %269 = vmatpush1.msra.mxu0 %v209
    %270 = vmatprep.subr.mxu0 0.0
    %271 = vmatpush1.msra.mxu0 %v210
    %272 = vmatprep.subr.mxu0 0.0
    %273 = vmatpush1.msra.mxu0 %v211
    %274 = vmatprep.subr.mxu0 0.0
    %275 = vmatpush1.msra.mxu0 %v212
    %276 = vmatprep.subr.mxu0 0.0
    %277 = vmatpush1.msra.mxu0 %v213
    %278 = vmatprep.subr.mxu0 0.0
    %279 = vmatpush1.msra.mxu0 %v214
    %280 = vmatprep.subr.mxu0 0.0
    %281 = vmatpush1.msra.mxu0 %v215
    %282 = vmatprep.subr.mxu0 0.0
    %283 = vmatpush1.msra.mxu0 %v216
    %284 = vmatprep.subr.mxu0 0.0
    %285 = vmatpush1.msra.mxu0 %v217
    %286 = vmatprep.subr.mxu0 0.0
    %287 = vmatpush1.msra.mxu0 %v218
    %288 = vmatprep.subr.mxu0 0.0
    %289 = vmatpush1.msra.mxu0 %v219
    %290 = vmatprep.subr.mxu0 0.0
    %291 = vmatpush1.msra.mxu0 %v220
    %292 = vmatprep.mubr.f32.mxu0 %v186
    %293 = vmatmul.mubr.f32.gmra.mrb[0].mxu0 %v185
    %v294 = vpop.f32.mrb[0].mxu0
    %v295 = vadd.f32 %v226, %v294
    %v296 = vpop.f32.mrb[0].mxu0
    %297 = vmatprep.mubr.f32.mxu0 %v188
    %298 = vmatmul.mubr.f32.gmra.mrb[0].mxu0 %v187
    %v299 = vpop.f32.mrb[0].mxu0
    %v300 = vadd.f32 %v226, %v299
    %v301 = vpop.f32.mrb[0].mxu0
    %302 = vdwg.mxu0
    %303 = vst [vmem:[#allocation8] sm:$0xff] %v295
    %304 = vst [vmem:[#allocation8 + $0x8] sm:$0xff] %v300
    // Predicated region
    $region34: #{tpu_custom_call.1} parent=1 // pred_check
      _
    $region35: #{tpu_custom_call.1} parent=1 // pred_check_branch
      %306 = sbr.rel (0) target = $region37
    $region36: #{tpu_custom_call.1} parent=1 // pred_region
      %s308 = ssub.s32 256, 256
      %309 = vsyncadd [#allocation4], %s308
      %s310 = sshll.u32 [#allocation8], 4
      %s311 = int_to_ptr.vmem [resolvable:$true] %s310
      %316 = dma.vmem_to_hbm [thread:$0]  %s311, 256, %s5, [#allocation4], 128, 128, 8
    $region37: #{tpu_custom_call.1} parent=1 // pred_fallthru
      _
    // Predicated region
    $region38: #{tpu_custom_call.1} parent=1 // pred_check
      _
    $region39: #{tpu_custom_call.1} parent=1 // pred_check_branch
      %318 = sbr.rel (0) target = $region41
    $region40: #{tpu_custom_call.1} parent=1 // pred_region
      %319 = dma.done [#allocation4], 256
    $region41: #{tpu_custom_call.1} parent=1 // pred_fallthru
      _
    %320 = vsyncpa [#allocation3], 1
    %321 = vsyncpa [#allocation6], 1
    %322 = vsyncpa [#allocation4], 1

</llo_original>
